<compile_context>
chip_gen: v7x
topology: tpu7x:2x2x1
jax: 0.10.0
libtpu: 0.0.40
codegen_flags: <defaults>
</compile_context>

<pallas_src>
import functools
import math

import jax
import jax.numpy as jnp
from jax.experimental import pallas as pl
from jax.experimental.pallas import tpu as pltpu


def _pe_add_kernel(x_ref, pe_ref, o_ref, *, batch, d_model):
    # x_ref / o_ref : (ts, batch * d_model) lane-dense tiles of the input/output
    # pe_ref        : (ts, d_model) matching rows of the positional table
    pe_tile = pe_ref[...]                        # one dense load per grid step
    if batch == 1:
        o_ref[...] = x_ref[...] + pe_tile        # single full-width store
    else:
        # Static unroll over batch: each slice is a lane-offset window of the
        # flat row (dense, unmasked vld/vst whenever d_model % 128 == 0).
        for b in range(batch):
            lo = b * d_model
            o_ref[:, lo:lo + d_model] = x_ref[:, lo:lo + d_model] + pe_tile


def make_positional_encoding(d_model, max_len=5000, dtype=jnp.float32):
    """Precompute the (max_len, d_model) sinusoidal table (matches PyTorch)."""
    position = jnp.arange(0, max_len, dtype=jnp.float32)[:, None]            # (L, 1)
    div_term = jnp.exp(
        jnp.arange(0, d_model, 2, dtype=jnp.float32) * (-math.log(10000.0) / d_model)
    )                                                                         # (D/2,)
    angles = position * div_term                                              # (L, D/2)
    pe = jnp.zeros((max_len, d_model), dtype=jnp.float32)
    pe = pe.at[:, 0::2].set(jnp.sin(angles))
    pe = pe.at[:, 1::2].set(jnp.cos(angles))
    return pe.astype(dtype)


# Double-buffered working-set budget; stays under the smallest scoped-VMEM
# default (16 MiB on v5e) without needing vmem_limit_bytes overrides.
_VMEM_BUDGET_BYTES = 12 << 20


def positional_encoding_forward(x, pe, *, block_rows=None):
    """x: (S, B, D); pe: (max_len, D). Returns x + pe[:S][:, None, :] (eval-mode dropout)."""
    S, B, D = x.shape

    # Hoist the dtype cast out of the kernel (one-time; halves pe HBM bytes for bf16 x).
    if pe.dtype != x.dtype:
        pe = pe.astype(x.dtype)

    # Contiguous 2-D lane-dense view; reshape of a contiguous array is free.
    x2 = x.reshape(S, B * D)

    itemsize = jnp.dtype(x.dtype).itemsize
    sub = {4: 8, 2: 16, 1: 32}.get(itemsize, 8)        # sublane quantum per dtype

    if block_rows is not None:
        ts = max(sub, (block_rows + sub - 1) // sub * sub)
    else:
        # Per-step footprint with 2-deep pipelining of x-in, out and pe:
        #   2 * ts * (B*D + B*D + D) * itemsize  <=  budget
        per_row_bytes = (2 * B * D + D) * itemsize
        ts = _VMEM_BUDGET_BYTES // (2 * max(per_row_bytes, 1))
        ts = max(sub, (ts // sub) * sub)
    if ts >= S:
        ts = S                                          # whole seq fits in one block
    grid = (pl.cdiv(S, ts),)

    # Pass the full pe buffer and let the BlockSpec window it (avoids an extra
    # pe[:S] HBM copy). Only slice when ts == S is not a sublane multiple, so
    # the "(8,128)-divisible or full-extent" block constraint holds.
    pe_in = pe if ts % sub == 0 else pe[:S]

    kernel = functools.partial(_pe_add_kernel, batch=B, d_model=D)

    out2 = pl.pallas_call(
        kernel,
        out_shape=jax.ShapeDtypeStruct((S, B * D), x.dtype),
        grid_spec=pltpu.PrefetchScalarGridSpec(
            num_scalar_prefetch=0,
            grid=grid,
            in_specs=[
                pl.BlockSpec((ts, B * D), lambda i: (i, 0)),
                pl.BlockSpec((ts, D), lambda i: (i, 0)),
            ],
            out_specs=pl.BlockSpec((ts, B * D), lambda i: (i, 0)),
        ),
        compiler_params=pltpu.CompilerParams(
            dimension_semantics=("parallel",),
        ),
    )(x2, pe_in)

    return out2.reshape(S, B, D)


if __name__ == "__main__":
    key = jax.random.PRNGKey(0)

    # Small shapes consistent with the module: seq=8, batch=2, d_model=32.
    S, B, D = 8, 2, 32
    max_len = 64  # smaller than 5000 for a quick test; same construction
    x = jax.random.normal(key, (S, B, D), dtype=jnp.float32)
    pe = make_positional_encoding(D, max_len=max_len, dtype=jnp.float32)

    out = jax.block_until_ready(positional_encoding_forward(x, pe))
    ref = x + pe[:S][:, None, :]
    assert out.shape == (S, B, D)
    assert jnp.allclose(out, ref, atol=1e-6), "mismatch vs reference (single-block path)"

    # Exercise the tiled multi-block path (forced small tile + ragged edge block).
    S2 = 20
    x_b = jax.random.normal(jax.random.PRNGKey(1), (S2, B, D), dtype=jnp.float32)
    out_b = jax.block_until_ready(positional_encoding_forward(x_b, pe, block_rows=8))
    ref_b = x_b + pe[:S2][:, None, :]
    assert out_b.shape == (S2, B, D)
    assert jnp.allclose(out_b, ref_b, atol=1e-6), "mismatch vs reference (tiled path)"

    print("KERNEL_OK")
</pallas_src>

<mosaic_0001>
module attributes {stable_mosaic.version = 11 : i64} {
  func.func @_pe_add_kernel(%arg0: i32, %arg1: memref<8x64xf32, #tpu.memory_space<vmem>>, %arg2: memref<8x32xf32, #tpu.memory_space<vmem>>, %arg3: memref<8x64xf32, #tpu.memory_space<vmem>>) attributes {dimension_semantics = [#tpu.dimension_semantics<parallel>], iteration_bounds = array<i64: 1>, scalar_prefetch = 0 : i64, scratch_operands = 0 : i64, tpu.core_type = #tpu.core_type<tc>, window_params = [{transform_indices = @transform_0, window_bounds = array<i64: 8, 64>}, {transform_indices = @transform_1, window_bounds = array<i64: 8, 32>}, {transform_indices = @transform_2, window_bounds = array<i64: 8, 64>}]} {
    %c0 = arith.constant 0 : index
    %c0_0 = arith.constant 0 : index
    %0 = vector.load %arg2[%c0, %c0_0] : memref<8x32xf32, #tpu.memory_space<vmem>>, vector<8x32xf32>
    %c0_1 = arith.constant 0 : index
    %c0_2 = arith.constant 0 : index
    %1 = vector.load %arg1[%c0_1, %c0_2] : memref<8x64xf32, #tpu.memory_space<vmem>>, vector<8x32xf32>
    %2 = arith.addf %1, %0 : vector<8x32xf32>
    %c0_3 = arith.constant 0 : index
    %c0_4 = arith.constant 0 : index
    %3 = vector.load %arg3[%c0_3, %c0_4] : memref<8x64xf32, #tpu.memory_space<vmem>>, vector<8x32xf32>
    tpu.vector_store %arg3[%c0_3, %c0_4], %2 {strides = array<i32>} : memref<8x64xf32, #tpu.memory_space<vmem>>, vector<8x32xf32>,
    %c0_5 = arith.constant 0 : index
    %c32 = arith.constant 32 : index
    %4 = vector.load %arg1[%c0_5, %c32] : memref<8x64xf32, #tpu.memory_space<vmem>>, vector<8x32xf32>
    %5 = arith.addf %4, %0 : vector<8x32xf32>
    %c0_6 = arith.constant 0 : index
    %c32_7 = arith.constant 32 : index
    %6 = vector.load %arg3[%c0_6, %c32_7] : memref<8x64xf32, #tpu.memory_space<vmem>>, vector<8x32xf32>
    tpu.vector_store %arg3[%c0_6, %c32_7], %5 {strides = array<i32>} : memref<8x64xf32, #tpu.memory_space<vmem>>, vector<8x32xf32>,
    return
  }
  func.func @transform_0(%arg0: i32) -> (i32, i32) {
    %c0_i32 = arith.constant 0 : i32
    %c0_i32_0 = arith.constant 0 : i32
    return %arg0, %c0_i32 : i32, i32
  }
  func.func @transform_1(%arg0: i32) -> (i32, i32) {
    %c0_i32 = arith.constant 0 : i32
    %c0_i32_0 = arith.constant 0 : i32
    return %arg0, %c0_i32 : i32, i32
  }
  func.func @transform_2(%arg0: i32) -> (i32, i32) {
    %c0_i32 = arith.constant 0 : i32
    %c0_i32_0 = arith.constant 0 : i32
    return %arg0, %c0_i32 : i32, i32
  }
}

</mosaic_0001>

<llo_original>
// kernel: tpu_custom_call.1
$region0: #{tpu_custom_call.1}
  #allocation0 [shape = 'u32[]', space=smem, size = 0x4, offset = 0x4, fixed_abs, tag = 'smem constant byte address 0x4 - core index']
  #allocation1 [shape = 'u32[144,128]{1,0:T(1,128)}', space=vmem, size = 0x12000, scoped, tag = 'internal scratch']
  %s0 = inlined_call_operand.vmem [shape: f32[8,64], index: 0, kind: input, shape index: {}]
  %s1 = inlined_call_operand.vmem [shape: f32[64,32], index: 1, kind: input, shape index: {}]
  %s2 = inlined_call_operand.hbm [shape: f32[8,64], index: 2, kind: output, shape index: {}]
  %s3 = sld [smem:[#allocation0]]
  $region18: #{tpu_custom_call.1} parent=0
    _
  %s5 = ssub.s32 1, %s3
  %s6 = scalar_select 0, %s5, %s3
  $region1: #{tpu_custom_call.1} parent=0
    #allocation2 [shape = 'u8[4096]{0}', space=vmem, size = 0x1000, scoped, tag = 'output window, operand 0, single buffered']
    #allocation3 [shape = 's32[1]{0}', space=sflag, size = 0x4, scoped, tag = 'scoped memory for tpu_custom_call.1']
    %7 = vsyncpa [#allocation3], 0
    // Predicated region
    $region2: #{tpu_custom_call.1} parent=1 // pred_check
      _
    $region3: #{tpu_custom_call.1} parent=1 // pred_check_branch
      %9 = sbr.rel (0) target = $region5
    $region4: #{tpu_custom_call.1} parent=1 // pred_region
      _
    $region5: #{tpu_custom_call.1} parent=1 // pred_fallthru
      _
    // Predicated region
    $region6: #{tpu_custom_call.1} parent=1 // pred_check
      _
    $region7: #{tpu_custom_call.1} parent=1 // pred_check_branch
      %11 = sbr.rel (0) target = $region9
    $region8: #{tpu_custom_call.1} parent=1 // pred_region
      _
    $region9: #{tpu_custom_call.1} parent=1 // pred_fallthru
      _
    %v12 = vld [vmem:[%s1] sm:$0xff]
    %v13 = vld [vmem:[%s0] sm:$0xff]
    %v14 = vadd.f32 %v13, %v12
    %vm15 = vcmask 261120
    %16 = vst.msk [vmem:[#allocation2] sm:$0xff] %vm15, %v14
    %v17 = vld [vmem:[%s0] sm:$0xff]
    %19 = vrot.lane.b32.xlu0 %v12, 32
    %v20 = vpop.permute.xlu0 %19
    %v22 = vadd.f32 %v17, %v20
    %vm23 = vcmask 523520
    %24 = vst.msk [vmem:[#allocation2] sm:$0xff] %vm23, %v22
    // Predicated region
    $region10: #{tpu_custom_call.1} parent=1 // pred_check
      _
    $region11: #{tpu_custom_call.1} parent=1 // pred_check_branch
      %26 = sbr.rel (0) target = $region13
    $region12: #{tpu_custom_call.1} parent=1 // pred_region
      %s28 = ssub.s32 128, 128
      %29 = vsyncadd [#allocation3], %s28
      %s31 = sshll.u32 [#allocation2], 4
      %s32 = int_to_ptr.vmem [resolvable:$true] %s31
      %34 = dma.vmem_to_hbm [thread:$0]  %s32, 128, %s2, [#allocation3]
    $region13: #{tpu_custom_call.1} parent=1 // pred_fallthru
      _
    // Predicated region
    $region14: #{tpu_custom_call.1} parent=1 // pred_check
      _
    $region15: #{tpu_custom_call.1} parent=1 // pred_check_branch
      %36 = sbr.rel (0) target = $region17
    $region16: #{tpu_custom_call.1} parent=1 // pred_region
      %37 = dma.done [#allocation3], 128
    $region17: #{tpu_custom_call.1} parent=1 // pred_fallthru
      _
    %38 = vsyncpa [#allocation3], 1

</llo_original>
